<compile_context>
chip_gen: v7x
topology: tpu7x:2x2x1
jax: 0.10.0
libtpu: 0.0.40
codegen_flags: <defaults>
</compile_context>

<pallas_src>
import functools

import jax
import jax.numpy as jnp
from jax.experimental import pallas as pl
from jax.experimental.pallas import tpu as pltpu

K_IN = 784
H = 64
N_CLASSES = 10


def _round_up(a, m):
    return (a + m - 1) // m * m


def _mlp_kernel(x_ref,
                w1_ref, b1_ref,
                w2_ref, b2_ref,
                w3_ref, b3_ref,
                w4_ref, b4_ref,
                o_ref):
    """One (TM, 784) batch tile: 4 matmuls + ReLUs + log_softmax."""
    # x arrives as f32 straight from HBM; cast to bf16 only as the MXU feed
    # for layer 1 (f32 accumulation).  Layers 2-4 are tiny (K=64), keep f32.
    x = x_ref[...].astype(jnp.bfloat16)                              # (TM, 784)

    h = jnp.dot(x, w1_ref[...], preferred_element_type=jnp.float32) + b1_ref[...]
    h = jnp.maximum(h, 0.0)

    h = jnp.dot(h, w2_ref[...], preferred_element_type=jnp.float32) + b2_ref[...]
    h = jnp.maximum(h, 0.0)

    h = jnp.dot(h, w3_ref[...], preferred_element_type=jnp.float32) + b3_ref[...]
    h = jnp.maximum(h, 0.0)

    logits = jnp.dot(h, w4_ref[...], preferred_element_type=jnp.float32) + b4_ref[...]
    # logits: logical (TM, 10); Mosaic masks the padded lanes in the
    # reductions below, so no padded-class bias trick is needed.
    m = jnp.max(logits, axis=-1, keepdims=True)
    shifted = logits - m
    lse = jnp.log(jnp.sum(jnp.exp(shifted), axis=-1, keepdims=True))
    o_ref[...] = (shifted - lse).astype(o_ref.dtype)                 # (TM, 10)


@functools.partial(jax.jit, static_argnames=("tm",))
def net_forward(x, params, tm=4096):
    """x: (B, 784) f32 -> (B, 10) f32 log-probs."""
    w1, b1, w2, b2, w3, b3, w4, b4 = params
    B = x.shape[0]

    # x tile is f32 (8 rows/sublane), so 8-row alignment is the natural
    # granule; tm itself is rounded to 16 (harmless, and correct if the tile
    # dtype is ever switched back to bf16).
    tm = max(16, _round_up(tm, 16))
    TM = min(tm, _round_up(B, 8))
    # v7x megacore: keep >= 2 grid steps for reasonably sized batches so the
    # "parallel" batch axis shards across both TensorCores.
    if B >= 512 and pl.cdiv(B, TM) < 2:
        TM = _round_up((B + 1) // 2, 16)
    n_tiles = pl.cdiv(B, TM)

    # w1 is the only weight worth shipping as bf16 (one-time ~100 KB convert);
    # it feeds the bf16 MXU pass directly.  Everything else stays f32.
    w1_bf = w1.astype(jnp.bfloat16)

    const = lambda shape: pl.BlockSpec(shape, lambda i: (0, 0))

    flops = 2 * B * (K_IN * H + H * H + H * H + H * N_CLASSES)
    bytes_accessed = (B * K_IN * 4 + B * N_CLASSES * 4               # x in, out
                      + K_IN * H * 2                                  # w1 (bf16)
                      + 2 * H * H * 4 + H * N_CLASSES * 4             # w2, w3, w4
                      + (3 * H + N_CLASSES) * 4)                      # biases
    cost = pl.CostEstimate(flops=flops,
                           transcendentals=B * (N_CLASSES + 1),
                           bytes_accessed=bytes_accessed)

    # Double-buffered x + out tiles dominate VMEM; weights are ~0.2 MiB.
    tile_bytes = 2 * TM * (K_IN + N_CLASSES) * 4
    vmem_limit = max(32 * 1024 * 1024,
                     min(tile_bytes + 4 * 1024 * 1024, 96 * 1024 * 1024))

    out = pl.pallas_call(
        _mlp_kernel,
        out_shape=jax.ShapeDtypeStruct((B, N_CLASSES), jnp.float32),
        grid_spec=pltpu.PrefetchScalarGridSpec(
            num_scalar_prefetch=0,
            grid=(n_tiles,),
            in_specs=[
                pl.BlockSpec((TM, K_IN), lambda i: (i, 0)),      # x: batch-tiled
                const((K_IN, H)),      const((1, H)),            # w1, b1 (resident)
                const((H, H)),         const((1, H)),            # w2, b2
                const((H, H)),         const((1, H)),            # w3, b3
                const((H, N_CLASSES)), const((1, N_CLASSES)),    # w4, b4
            ],
            out_specs=pl.BlockSpec((TM, N_CLASSES), lambda i: (i, 0)),
        ),
        compiler_params=pltpu.CompilerParams(
            dimension_semantics=("parallel",),
            vmem_limit_bytes=vmem_limit,
        ),
        cost_estimate=cost,
    )(x, w1_bf, b1, w2, b2, w3, b3, w4, b4)

    return out


def init_params(key):
    """torch.nn.Linear-style init; weights stored (in_features, out_features)."""
    dims = [(784, 64), (64, 64), (64, 64), (64, 10)]
    params = []
    keys = jax.random.split(key, 2 * len(dims))
    for i, (fan_in, fan_out) in enumerate(dims):
        bound = 1.0 / jnp.sqrt(jnp.float32(fan_in))
        w = jax.random.uniform(keys[2 * i], (fan_in, fan_out),
                               minval=-bound, maxval=bound, dtype=jnp.float32)
        b = jax.random.uniform(keys[2 * i + 1], (1, fan_out),
                               minval=-bound, maxval=bound, dtype=jnp.float32)
        params.extend([w, b])
    return tuple(params)


def _reference_forward_quantized(x, params):
    """Plain-JAX reference with the same bf16 quantization of x / W1."""
    w1, b1, w2, b2, w3, b3, w4, b4 = params
    xq = x.astype(jnp.bfloat16).astype(jnp.float32)
    w1q = w1.astype(jnp.bfloat16).astype(jnp.float32)
    hp = jax.lax.Precision.HIGHEST
    h = jax.nn.relu(jnp.dot(xq, w1q, precision=hp) + b1)
    h = jax.nn.relu(jnp.dot(h, w2, precision=hp) + b2)
    h = jax.nn.relu(jnp.dot(h, w3, precision=hp) + b3)
    logits = jnp.dot(h, w4, precision=hp) + b4
    return jax.nn.log_softmax(logits, axis=-1)


def _reference_forward_f32(x, params):
    """Full-precision reference (loose sanity check of overall semantics)."""
    w1, b1, w2, b2, w3, b3, w4, b4 = params
    hp = jax.lax.Precision.HIGHEST
    h = jax.nn.relu(jnp.dot(x, w1, precision=hp) + b1)
    h = jax.nn.relu(jnp.dot(h, w2, precision=hp) + b2)
    h = jax.nn.relu(jnp.dot(h, w3, precision=hp) + b3)
    logits = jnp.dot(h, w4, precision=hp) + b4
    return jax.nn.log_softmax(logits, axis=-1)


if __name__ == "__main__":
    key = jax.random.PRNGKey(0)
    k_x, k_p = jax.random.split(key)
    params = init_params(k_p)

    # --- small single-tile test ---------------------------------------------
    B = 8
    x = jax.random.normal(k_x, (B, 784), dtype=jnp.float32)
    out = net_forward(x, params)
    jax.block_until_ready(out)
    assert out.shape == (B, 10), out.shape

    ref_q = _reference_forward_quantized(x, params)
    assert jnp.allclose(out, ref_q, atol=2e-3, rtol=2e-3), "mismatch vs bf16-quantized reference"
    ref_f = _reference_forward_f32(x, params)
    assert jnp.allclose(out, ref_f, atol=1e-1, rtol=1e-1), "mismatch vs f32 reference"
    assert jnp.allclose(jnp.sum(jnp.exp(out), axis=-1), 1.0, atol=1e-3)

    # --- multi-tile test (batch grid + ragged last block, no host padding) ---
    B2 = 40
    x2 = jax.random.normal(jax.random.PRNGKey(1), (B2, 784), dtype=jnp.float32)
    out2 = net_forward(x2, params, tm=16)       # 3 grid steps, 8-row ragged tail
    jax.block_until_ready(out2)
    assert out2.shape == (B2, 10), out2.shape
    ref2 = _reference_forward_quantized(x2, params)
    assert jnp.allclose(out2, ref2, atol=2e-3, rtol=2e-3), "multi-tile mismatch"
    assert jnp.allclose(jnp.sum(jnp.exp(out2), axis=-1), 1.0, atol=1e-3)

    print("KERNEL_OK")
</pallas_src>

<mosaic_0001>
module attributes {stable_mosaic.version = 11 : i64} {
  func.func @_mlp_kernel(%arg0: i32, %arg1: memref<8x784xf32, #tpu.memory_space<vmem>>, %arg2: memref<784x64xbf16, #tpu.memory_space<vmem>>, %arg3: memref<1x64xf32, #tpu.memory_space<vmem>>, %arg4: memref<64x64xf32, #tpu.memory_space<vmem>>, %arg5: memref<1x64xf32, #tpu.memory_space<vmem>>, %arg6: memref<64x64xf32, #tpu.memory_space<vmem>>, %arg7: memref<1x64xf32, #tpu.memory_space<vmem>>, %arg8: memref<64x10xf32, #tpu.memory_space<vmem>>, %arg9: memref<1x10xf32, #tpu.memory_space<vmem>>, %arg10: memref<8x10xf32, #tpu.memory_space<vmem>>) attributes {dimension_semantics = [#tpu.dimension_semantics<parallel>], iteration_bounds = array<i64: 1>, scalar_prefetch = 0 : i64, scratch_operands = 0 : i64, tpu.core_type = #tpu.core_type<tc>, window_params = [{transform_indices = @transform_0, window_bounds = array<i64: 8, 784>}, {pipeline_mode = #tpu.pipeline_mode<synchronous>, transform_indices = @transform_1, window_bounds = array<i64: 784, 64>}, {pipeline_mode = #tpu.pipeline_mode<synchronous>, transform_indices = @transform_2, window_bounds = array<i64: 1, 64>}, {pipeline_mode = #tpu.pipeline_mode<synchronous>, transform_indices = @transform_3, window_bounds = array<i64: 64, 64>}, {pipeline_mode = #tpu.pipeline_mode<synchronous>, transform_indices = @transform_4, window_bounds = array<i64: 1, 64>}, {pipeline_mode = #tpu.pipeline_mode<synchronous>, transform_indices = @transform_5, window_bounds = array<i64: 64, 64>}, {pipeline_mode = #tpu.pipeline_mode<synchronous>, transform_indices = @transform_6, window_bounds = array<i64: 1, 64>}, {pipeline_mode = #tpu.pipeline_mode<synchronous>, transform_indices = @transform_7, window_bounds = array<i64: 64, 10>}, {pipeline_mode = #tpu.pipeline_mode<synchronous>, transform_indices = @transform_8, window_bounds = array<i64: 1, 10>}, {transform_indices = @transform_9, window_bounds = array<i64: 8, 10>}]} {
    %c0 = arith.constant 0 : index
    %c0_0 = arith.constant 0 : index
    %0 = vector.load %arg1[%c0, %c0_0] : memref<8x784xf32, #tpu.memory_space<vmem>>, vector<8x784xf32>
    %1 = arith.truncf %0 : vector<8x784xf32> to vector<8x784xbf16>
    %c0_1 = arith.constant 0 : index
    %c0_2 = arith.constant 0 : index
    %2 = vector.load %arg2[%c0_1, %c0_2] : memref<784x64xbf16, #tpu.memory_space<vmem>>, vector<784x64xbf16>
    %cst = arith.constant dense<0.000000e+00> : vector<8x64xf32>
    %3 = tpu.matmul %1, %2, %cst {dimension_numbers = #tpu.dot_dimension_numbers<[1], [0], [0], [1], [0, 0, 1, 1], [], []>} : vector<8x784xbf16>, vector<784x64xbf16>, vector<8x64xf32> -> vector<8x64xf32>
    %c0_3 = arith.constant 0 : index
    %c0_4 = arith.constant 0 : index
    %4 = vector.load %arg3[%c0_3, %c0_4] : memref<1x64xf32, #tpu.memory_space<vmem>>, vector<1x64xf32>
    %5 = vector.broadcast %4 : vector<1x64xf32> to vector<8x64xf32>
    %6 = arith.addf %3, %5 : vector<8x64xf32>
    %cst_5 = arith.constant 0.000000e+00 : f32
    %7 = vector.broadcast %cst_5 : f32 to vector<8x64xf32>
    %8 = arith.maximumf %6, %7 : vector<8x64xf32>
    %c0_6 = arith.constant 0 : index
    %c0_7 = arith.constant 0 : index
    %9 = vector.load %arg4[%c0_6, %c0_7] : memref<64x64xf32, #tpu.memory_space<vmem>>, vector<64x64xf32>
    %cst_8 = arith.constant dense<0.000000e+00> : vector<8x64xf32>
    %10 = tpu.matmul %8, %9, %cst_8 {dimension_numbers = #tpu.dot_dimension_numbers<[1], [0], [0], [1], [0, 0, 1, 1], [], []>} : vector<8x64xf32>, vector<64x64xf32>, vector<8x64xf32> -> vector<8x64xf32>
    %c0_9 = arith.constant 0 : index
    %c0_10 = arith.constant 0 : index
    %11 = vector.load %arg5[%c0_9, %c0_10] : memref<1x64xf32, #tpu.memory_space<vmem>>, vector<1x64xf32>
    %12 = vector.broadcast %11 : vector<1x64xf32> to vector<8x64xf32>
    %13 = arith.addf %10, %12 : vector<8x64xf32>
    %cst_11 = arith.constant 0.000000e+00 : f32
    %14 = vector.broadcast %cst_11 : f32 to vector<8x64xf32>
    %15 = arith.maximumf %13, %14 : vector<8x64xf32>
    %c0_12 = arith.constant 0 : index
    %c0_13 = arith.constant 0 : index
    %16 = vector.load %arg6[%c0_12, %c0_13] : memref<64x64xf32, #tpu.memory_space<vmem>>, vector<64x64xf32>
    %cst_14 = arith.constant dense<0.000000e+00> : vector<8x64xf32>
    %17 = tpu.matmul %15, %16, %cst_14 {dimension_numbers = #tpu.dot_dimension_numbers<[1], [0], [0], [1], [0, 0, 1, 1], [], []>} : vector<8x64xf32>, vector<64x64xf32>, vector<8x64xf32> -> vector<8x64xf32>
    %c0_15 = arith.constant 0 : index
    %c0_16 = arith.constant 0 : index
    %18 = vector.load %arg7[%c0_15, %c0_16] : memref<1x64xf32, #tpu.memory_space<vmem>>, vector<1x64xf32>
    %19 = vector.broadcast %18 : vector<1x64xf32> to vector<8x64xf32>
    %20 = arith.addf %17, %19 : vector<8x64xf32>
    %cst_17 = arith.constant 0.000000e+00 : f32
    %21 = vector.broadcast %cst_17 : f32 to vector<8x64xf32>
    %22 = arith.maximumf %20, %21 : vector<8x64xf32>
    %c0_18 = arith.constant 0 : index
    %c0_19 = arith.constant 0 : index
    %23 = vector.load %arg8[%c0_18, %c0_19] : memref<64x10xf32, #tpu.memory_space<vmem>>, vector<64x10xf32>
    %cst_20 = arith.constant dense<0.000000e+00> : vector<8x10xf32>
    %24 = tpu.matmul %22, %23, %cst_20 {dimension_numbers = #tpu.dot_dimension_numbers<[1], [0], [0], [1], [0, 0, 1, 1], [], []>} : vector<8x64xf32>, vector<64x10xf32>, vector<8x10xf32> -> vector<8x10xf32>
    %c0_21 = arith.constant 0 : index
    %c0_22 = arith.constant 0 : index
    %25 = vector.load %arg9[%c0_21, %c0_22] : memref<1x10xf32, #tpu.memory_space<vmem>>, vector<1x10xf32>
    %26 = vector.broadcast %25 : vector<1x10xf32> to vector<8x10xf32>
    %27 = arith.addf %24, %26 : vector<8x10xf32>
    %cst_23 = arith.constant dense<0xFF800000> : vector<8xf32>
    %28 = vector.multi_reduction <maximumf>, %27, %cst_23 [1] : vector<8x10xf32> to vector<8xf32>
    %29 = vector.shape_cast %28 : vector<8xf32> to vector<8x1xf32>
    %30 = vector.broadcast %29 : vector<8x1xf32> to vector<8x10xf32>
    %31 = arith.subf %27, %30 : vector<8x10xf32>
    %32 = math.exp %31 : vector<8x10xf32>
    %cst_24 = arith.constant dense<0.000000e+00> : vector<8xf32>
    %33 = vector.multi_reduction <add>, %32, %cst_24 [1] : vector<8x10xf32> to vector<8xf32>
    %34 = vector.shape_cast %33 : vector<8xf32> to vector<8x1xf32>
    %35 = math.log %34 : vector<8x1xf32>
    %36 = vector.broadcast %35 : vector<8x1xf32> to vector<8x10xf32>
    %37 = arith.subf %31, %36 : vector<8x10xf32>
    %c0_25 = arith.constant 0 : index
    %c0_26 = arith.constant 0 : index
    %38 = vector.load %arg10[%c0_25, %c0_26] : memref<8x10xf32, #tpu.memory_space<vmem>>, vector<8x10xf32>
    tpu.vector_store %arg10[%c0_25, %c0_26], %37 {strides = array<i32>} : memref<8x10xf32, #tpu.memory_space<vmem>>, vector<8x10xf32>,
    return
  }
  func.func @transform_0(%arg0: i32) -> (i32, i32) {
    %c0_i32 = arith.constant 0 : i32
    %c0_i32_0 = arith.constant 0 : i32
    return %arg0, %c0_i32 : i32, i32
  }
  func.func @transform_1(%arg0: i32) -> (i32, i32) {
    %c0_i32 = arith.constant 0 : i32
    %c0_i32_0 = arith.constant 0 : i32
    %c0_i32_1 = arith.constant 0 : i32
    return %c0_i32, %c0_i32_0 : i32, i32
  }
  func.func @transform_2(%arg0: i32) -> (i32, i32) {
    %c0_i32 = arith.constant 0 : i32
    %c0_i32_0 = arith.constant 0 : i32
    %c0_i32_1 = arith.constant 0 : i32
    return %c0_i32, %c0_i32_0 : i32, i32
  }
  func.func @transform_3(%arg0: i32) -> (i32, i32) {
    %c0_i32 = arith.constant 0 : i32
    %c0_i32_0 = arith.constant 0 : i32
    %c0_i32_1 = arith.constant 0 : i32
    return %c0_i32, %c0_i32_0 : i32, i32
  }
  func.func @transform_4(%arg0: i32) -> (i32, i32) {
    %c0_i32 = arith.constant 0 : i32
    %c0_i32_0 = arith.constant 0 : i32
    %c0_i32_1 = arith.constant 0 : i32
    return %c0_i32, %c0_i32_0 : i32, i32
  }
  func.func @transform_5(%arg0: i32) -> (i32, i32) {
    %c0_i32 = arith.constant 0 : i32
    %c0_i32_0 = arith.constant 0 : i32
    %c0_i32_1 = arith.constant 0 : i32
    return %c0_i32, %c0_i32_0 : i32, i32
  }
  func.func @transform_6(%arg0: i32) -> (i32, i32) {
    %c0_i32 = arith.constant 0 : i32
    %c0_i32_0 = arith.constant 0 : i32
    %c0_i32_1 = arith.constant 0 : i32
    return %c0_i32, %c0_i32_0 : i32, i32
  }
  func.func @transform_7(%arg0: i32) -> (i32, i32) {
    %c0_i32 = arith.constant 0 : i32
    %c0_i32_0 = arith.constant 0 : i32
    %c0_i32_1 = arith.constant 0 : i32
    return %c0_i32, %c0_i32_0 : i32, i32
  }
  func.func @transform_8(%arg0: i32) -> (i32, i32) {
    %c0_i32 = arith.constant 0 : i32
    %c0_i32_0 = arith.constant 0 : i32
    %c0_i32_1 = arith.constant 0 : i32
    return %c0_i32, %c0_i32_0 : i32, i32
  }
  func.func @transform_9(%arg0: i32) -> (i32, i32) {
    %c0_i32 = arith.constant 0 : i32
    %c0_i32_0 = arith.constant 0 : i32
    return %arg0, %c0_i32 : i32, i32
  }
}

</mosaic_0001>

<llo_original>
// kernel: net_forward.1
$region0: #{net_forward.1}
  #allocation0 [shape = 'u32[]', space=smem, size = 0x4, offset = 0x4, fixed_abs, tag = 'smem constant byte address 0x4 - core index']
  #allocation1 [shape = 'u32[144,128]{1,0:T(1,128)}', space=vmem, size = 0x12000, scoped, tag = 'internal scratch']
  %s0 = inlined_call_operand.vmem [shape: f32[8,784], index: 0, kind: input, shape index: {}]
  %s1 = inlined_call_operand.vmem [shape: bf16[784,64], index: 1, kind: input, shape index: {}]
  %s2 = inlined_call_operand.vmem [shape: f32[1,64], index: 2, kind: input, shape index: {}]
  %s3 = inlined_call_operand.vmem [shape: f32[64,64], index: 3, kind: input, shape index: {}]
  %s4 = inlined_call_operand.vmem [shape: f32[1,64], index: 4, kind: input, shape index: {}]
  %s5 = inlined_call_operand.vmem [shape: f32[64,64], index: 5, kind: input, shape index: {}]
  %s6 = inlined_call_operand.vmem [shape: f32[1,64], index: 6, kind: input, shape index: {}]
  %s7 = inlined_call_operand.vmem [shape: f32[64,10], index: 7, kind: input, shape index: {}]
  %s8 = inlined_call_operand.vmem [shape: f32[1,10], index: 8, kind: input, shape index: {}]
  %s9 = inlined_call_operand.hbm [shape: f32[8,10], index: 9, kind: output, shape index: {}]
  %s10 = sld [smem:[#allocation0]]
  $region46: #{net_forward.1} parent=0
    _
  %s12 = ssub.s32 1, %s10
  %s13 = scalar_select 0, %s12, %s10
  $region1: #{net_forward.1} parent=0
    #allocation2 [shape = 'u8[4096]{0}', space=vmem, size = 0x1000, scoped, tag = 'output window, operand 0, single buffered']
    #allocation3 [shape = 's32[1]{0}', space=sflag, size = 0x4, scoped, tag = 'scoped memory for net_forward.1']
    %14 = vsyncpa [#allocation3], 0
    // Predicated region
    $region2: #{net_forward.1} parent=1 // pred_check
      _
    $region3: #{net_forward.1} parent=1 // pred_check_branch
      %16 = sbr.rel (0) target = $region5
    $region4: #{net_forward.1} parent=1 // pred_region
      _
    $region5: #{net_forward.1} parent=1 // pred_fallthru
      _
    // Predicated region
    $region6: #{net_forward.1} parent=1 // pred_check
      _
    $region7: #{net_forward.1} parent=1 // pred_check_branch
      %18 = sbr.rel (0) target = $region9
    $region8: #{net_forward.1} parent=1 // pred_region
      _
    $region9: #{net_forward.1} parent=1 // pred_fallthru
      _
    // Predicated region
    $region10: #{net_forward.1} parent=1 // pred_check
      _
    $region11: #{net_forward.1} parent=1 // pred_check_branch
      %20 = sbr.rel (0) target = $region13
    $region12: #{net_forward.1} parent=1 // pred_region
      _
    $region13: #{net_forward.1} parent=1 // pred_fallthru
      _
    // Predicated region
    $region14: #{net_forward.1} parent=1 // pred_check
      _
    $region15: #{net_forward.1} parent=1 // pred_check_branch
      %22 = sbr.rel (0) target = $region17
    $region16: #{net_forward.1} parent=1 // pred_region
      _
    $region17: #{net_forward.1} parent=1 // pred_fallthru
      _
    // Predicated region
    $region18: #{net_forward.1} parent=1 // pred_check
      _
    $region19: #{net_forward.1} parent=1 // pred_check_branch
      %24 = sbr.rel (0) target = $region21
    $region20: #{net_forward.1} parent=1 // pred_region
      _
    $region21: #{net_forward.1} parent=1 // pred_fallthru
      _
    // Predicated region
    $region22: #{net_forward.1} parent=1 // pred_check
      _
    $region23: #{net_forward.1} parent=1 // pred_check_branch
      %26 = sbr.rel (0) target = $region25
    $region24: #{net_forward.1} parent=1 // pred_region
      _
    $region25: #{net_forward.1} parent=1 // pred_fallthru
      _
    // Predicated region
    $region26: #{net_forward.1} parent=1 // pred_check
      _
    $region27: #{net_forward.1} parent=1 // pred_check_branch
      %28 = sbr.rel (0) target = $region29
    $region28: #{net_forward.1} parent=1 // pred_region
      _
    $region29: #{net_forward.1} parent=1 // pred_fallthru
      _
    // Predicated region
    $region30: #{net_forward.1} parent=1 // pred_check
      _
    $region31: #{net_forward.1} parent=1 // pred_check_branch
      %30 = sbr.rel (0) target = $region33
    $region32: #{net_forward.1} parent=1 // pred_region
      _
    $region33: #{net_forward.1} parent=1 // pred_fallthru
      _
    // Predicated region
    $region34: #{net_forward.1} parent=1 // pred_check
      _
    $region35: #{net_forward.1} parent=1 // pred_check_branch
      %32 = sbr.rel (0) target = $region37
    $region36: #{net_forward.1} parent=1 // pred_region
      _
    $region37: #{net_forward.1} parent=1 // pred_fallthru
      _
    %v34 = vld [vmem:[%s0] sm:$0xff]
    %v35 = vld [vmem:[%s0 + $0x8] sm:$0xff]
    %v36 = vld [vmem:[%s0 + $0x10] sm:$0xff]
    %v37 = vld [vmem:[%s0 + $0x18] sm:$0xff]
    %v38 = vld [vmem:[%s0 + $0x20] sm:$0xff]
    %v39 = vld [vmem:[%s0 + $0x28] sm:$0xff]
    %v40 = vld [vmem:[%s0 + $0x30] sm:$0xff]
    %v41 = vpack.c.bf16 %v34, %v34
    %v42 = vpack.c.bf16 %v35, %v35
    %v43 = vpack.c.bf16 %v36, %v36
    %v44 = vpack.c.bf16 %v37, %v37
    %v45 = vpack.c.bf16 %v38, %v38
    %v46 = vpack.c.bf16 %v39, %v39
    %v47 = vpack.c.bf16 %v40, %v40
    %v48 = vld [vmem:[%s1] sm:$0xf]
    %v49 = vld [vmem:[%s1 + $0x4] sm:$0xf]
    %v50 = vld [vmem:[%s1 + $0x8] sm:$0xf]
    %v51 = vld [vmem:[%s1 + $0xc] sm:$0xf]
    %v52 = vld [vmem:[%s1 + $0x10] sm:$0xf]
    %v53 = vld [vmem:[%s1 + $0x14] sm:$0xf]
    %v54 = vld [vmem:[%s1 + $0x18] sm:$0xf]
    %v55 = vld [vmem:[%s1 + $0x1c] sm:$0xf]
    %v56 = vld [vmem:[%s1 + $0x20] sm:$0xf]
    %v57 = vld [vmem:[%s1 + $0x24] sm:$0xf]
    %v58 = vld [vmem:[%s1 + $0x28] sm:$0xf]
    %v59 = vld [vmem:[%s1 + $0x2c] sm:$0xf]
    %v60 = vld [vmem:[%s1 + $0x30] sm:$0xf]
    %v61 = vld [vmem:[%s1 + $0x34] sm:$0xf]
    %v62 = vld [vmem:[%s1 + $0x38] sm:$0xf]
    %v63 = vld [vmem:[%s1 + $0x3c] sm:$0xf]
    %v64 = vld [vmem:[%s1 + $0x40] sm:$0xf]
    %v65 = vld [vmem:[%s1 + $0x44] sm:$0xf]
    %v66 = vld [vmem:[%s1 + $0x48] sm:$0xf]
    %v67 = vld [vmem:[%s1 + $0x4c] sm:$0xf]
    %v68 = vld [vmem:[%s1 + $0x50] sm:$0xf]
    %v69 = vld [vmem:[%s1 + $0x54] sm:$0xf]
    %v70 = vld [vmem:[%s1 + $0x58] sm:$0xf]
    %v71 = vld [vmem:[%s1 + $0x5c] sm:$0xf]
    %v72 = vld [vmem:[%s1 + $0x60] sm:$0xf]
    %v73 = vld [vmem:[%s1 + $0x64] sm:$0xf]
    %v74 = vld [vmem:[%s1 + $0x68] sm:$0xf]
    %v75 = vld [vmem:[%s1 + $0x6c] sm:$0xf]
    %v76 = vld [vmem:[%s1 + $0x70] sm:$0xf]
    %v77 = vld [vmem:[%s1 + $0x74] sm:$0xf]
    %v78 = vld [vmem:[%s1 + $0x78] sm:$0xf]
    %v79 = vld [vmem:[%s1 + $0x7c] sm:$0xf]
    %v80 = vld [vmem:[%s1 + $0x80] sm:$0xf]
    %v81 = vld [vmem:[%s1 + $0x84] sm:$0xf]
    %v82 = vld [vmem:[%s1 + $0x88] sm:$0xf]
    %v83 = vld [vmem:[%s1 + $0x8c] sm:$0xf]
    %v84 = vld [vmem:[%s1 + $0x90] sm:$0xf]
    %v85 = vld [vmem:[%s1 + $0x94] sm:$0xf]
    %v86 = vld [vmem:[%s1 + $0x98] sm:$0xf]
    %v87 = vld [vmem:[%s1 + $0x9c] sm:$0xf]
    %v88 = vld [vmem:[%s1 + $0xa0] sm:$0xf]
    %v89 = vld [vmem:[%s1 + $0xa4] sm:$0xf]
    %v90 = vld [vmem:[%s1 + $0xa8] sm:$0xf]
    %v91 = vld [vmem:[%s1 + $0xac] sm:$0xf]
    %v92 = vld [vmem:[%s1 + $0xb0] sm:$0xf]
    %v93 = vld [vmem:[%s1 + $0xb4] sm:$0xf]
    %v94 = vld [vmem:[%s1 + $0xb8] sm:$0xf]
    %v95 = vld [vmem:[%s1 + $0xbc] sm:$0xf]
    %v96 = vld [vmem:[%s1 + $0xc0] sm:$0xf]
    %v97 = vld [vmem:[%s1 + $0xc4] sm:$0xf]
    %v98 = vld [vmem:[%s1 + $0xc8] sm:$0xf]
    %v99 = vld [vmem:[%s1 + $0xcc] sm:$0xf]
    %v100 = vld [vmem:[%s1 + $0xd0] sm:$0xf]
    %v101 = vld [vmem:[%s1 + $0xd4] sm:$0xf]
    %v102 = vld [vmem:[%s1 + $0xd8] sm:$0xf]
    %v103 = vld [vmem:[%s1 + $0xdc] sm:$0xf]
    %v104 = vld [vmem:[%s1 + $0xe0] sm:$0xf]
    %v105 = vld [vmem:[%s1 + $0xe4] sm:$0xf]
    %v106 = vld [vmem:[%s1 + $0xe8] sm:$0xf]
    %v107 = vld [vmem:[%s1 + $0xec] sm:$0xf]
    %v108 = vld [vmem:[%s1 + $0xf0] sm:$0xf]
    %v109 = vld [vmem:[%s1 + $0xf4] sm:$0xf]
    %v110 = vld [vmem:[%s1 + $0xf8] sm:$0xf]
    %v111 = vld [vmem:[%s1 + $0xfc] sm:$0xf]
    %v112 = vld [vmem:[%s1 + $0x100] sm:$0xf]
    %v113 = vld [vmem:[%s1 + $0x104] sm:$0xf]
    %v114 = vld [vmem:[%s1 + $0x108] sm:$0xf]
    %v115 = vld [vmem:[%s1 + $0x10c] sm:$0xf]
    %v116 = vld [vmem:[%s1 + $0x110] sm:$0xf]
    %v117 = vld [vmem:[%s1 + $0x114] sm:$0xf]
    %v118 = vld [vmem:[%s1 + $0x118] sm:$0xf]
    %v119 = vld [vmem:[%s1 + $0x11c] sm:$0xf]
    %v120 = vld [vmem:[%s1 + $0x120] sm:$0xf]
    %v121 = vld [vmem:[%s1 + $0x124] sm:$0xf]
    %v122 = vld [vmem:[%s1 + $0x128] sm:$0xf]
    %v123 = vld [vmem:[%s1 + $0x12c] sm:$0xf]
    %v124 = vld [vmem:[%s1 + $0x130] sm:$0xf]
    %v125 = vld [vmem:[%s1 + $0x134] sm:$0xf]
    %v126 = vld [vmem:[%s1 + $0x138] sm:$0xf]
    %v127 = vld [vmem:[%s1 + $0x13c] sm:$0xf]
    %v128 = vld [vmem:[%s1 + $0x140] sm:$0xf]
    %v129 = vld [vmem:[%s1 + $0x144] sm:$0xf]
    %v130 = vld [vmem:[%s1 + $0x148] sm:$0xf]
    %v131 = vld [vmem:[%s1 + $0x14c] sm:$0xf]
    %v132 = vld [vmem:[%s1 + $0x150] sm:$0xf]
    %v133 = vld [vmem:[%s1 + $0x154] sm:$0xf]
    %v134 = vld [vmem:[%s1 + $0x158] sm:$0xf]
    %v135 = vld [vmem:[%s1 + $0x15c] sm:$0xf]
    %v136 = vld [vmem:[%s1 + $0x160] sm:$0xf]
    %v137 = vld [vmem:[%s1 + $0x164] sm:$0xf]
    %v138 = vld [vmem:[%s1 + $0x168] sm:$0xf]
    %v139 = vld [vmem:[%s1 + $0x16c] sm:$0xf]
    %v140 = vld [vmem:[%s1 + $0x170] sm:$0xf]
    %v141 = vld [vmem:[%s1 + $0x174] sm:$0xf]
    %v142 = vld [vmem:[%s1 + $0x178] sm:$0xf]
    %v143 = vld [vmem:[%s1 + $0x17c] sm:$0xf]
    %v144 = vld [vmem:[%s1 + $0x180] sm:$0xf]
    %v145 = vld [vmem:[%s1 + $0x184] sm:$0xf]
    %v146 = vld [vmem:[%s2] sm:$0x1]
    %v148 = vlaneseq
    %v149 = vshrl.u32 %v148, 7
    %v150 = vsub.s32 0, %v149
    %v151 = vrot.slane %v146, %v150
    %v251 = vunpack.c.l.b16 %v48
    %v252 = vunpack.c.l.b16 %v49
    %v253 = vunpack.c.l.b16 %v50
    %v254 = vunpack.c.l.b16 %v51
    %v255 = vunpack.c.l.b16 %v52
    %v256 = vunpack.c.l.b16 %v53
    %v257 = vunpack.c.l.b16 %v54
    %v258 = vunpack.c.l.b16 %v55
    %v259 = vunpack.c.l.b16 %v56
    %v260 = vunpack.c.l.b16 %v57
    %v261 = vunpack.c.l.b16 %v58
    %v262 = vunpack.c.l.b16 %v59
    %v263 = vunpack.c.l.b16 %v60
    %v264 = vunpack.c.l.b16 %v61
    %v265 = vunpack.c.l.b16 %v62
    %v266 = vunpack.c.l.b16 %v63
    %v267 = vunpack.c.l.b16 %v64
    %v268 = vunpack.c.l.b16 %v65
    %v269 = vunpack.c.l.b16 %v66
    %v270 = vunpack.c.l.b16 %v67
    %v271 = vunpack.c.l.b16 %v68
    %v272 = vunpack.c.l.b16 %v69
    %v273 = vunpack.c.l.b16 %v70
    %v274 = vunpack.c.l.b16 %v71
    %v275 = vunpack.c.l.b16 %v72
    %v276 = vunpack.c.l.b16 %v73
    %v277 = vunpack.c.l.b16 %v74
    %v278 = vunpack.c.l.b16 %v75
    %v279 = vunpack.c.l.b16 %v76
    %v280 = vunpack.c.l.b16 %v77
    %v281 = vunpack.c.l.b16 %v78
    %v282 = vunpack.c.l.b16 %v79
    %v283 = vunpack.c.l.b16 %v80
    %v284 = vunpack.c.l.b16 %v81
    %v285 = vunpack.c.l.b16 %v82
    %v286 = vunpack.c.l.b16 %v83
    %v287 = vunpack.c.l.b16 %v84
    %v288 = vunpack.c.l.b16 %v85
    %v289 = vunpack.c.l.b16 %v86
    %v290 = vunpack.c.l.b16 %v87
    %v291 = vunpack.c.l.b16 %v88
    %v292 = vunpack.c.l.b16 %v89
    %v293 = vunpack.c.l.b16 %v90
    %v294 = vunpack.c.l.b16 %v91
    %v295 = vunpack.c.l.b16 %v92
    %v296 = vunpack.c.l.b16 %v93
    %v297 = vunpack.c.l.b16 %v94
    %v298 = vunpack.c.l.b16 %v95
    %v299 = vunpack.c.l.b16 %v96
    %v300 = vunpack.c.l.b16 %v97
    %v301 = vunpack.c.l.b16 %v98
    %v302 = vunpack.c.l.b16 %v99
    %v303 = vunpack.c.l.b16 %v100
    %v304 = vunpack.c.l.b16 %v101
    %v305 = vunpack.c.l.b16 %v102
    %v306 = vunpack.c.l.b16 %v103
    %v307 = vunpack.c.l.b16 %v104
    %v308 = vunpack.c.l.b16 %v105
    %v309 = vunpack.c.l.b16 %v106
    %v310 = vunpack.c.l.b16 %v107
    %v311 = vunpack.c.l.b16 %v108
    %v312 = vunpack.c.l.b16 %v109
    %v313 = vunpack.c.l.b16 %v110
    %v314 = vunpack.c.l.b16 %v111
    %v315 = vunpack.c.l.b16 %v112
    %v316 = vunpack.c.l.b16 %v113
    %v317 = vunpack.c.l.b16 %v114
    %v318 = vunpack.c.l.b16 %v115
    %v319 = vunpack.c.l.b16 %v116
    %v320 = vunpack.c.l.b16 %v117
    %v321 = vunpack.c.l.b16 %v118
    %v322 = vunpack.c.l.b16 %v119
    %v323 = vunpack.c.l.b16 %v120
    %v324 = vunpack.c.l.b16 %v121
    %v325 = vunpack.c.l.b16 %v122
    %v326 = vunpack.c.l.b16 %v123
    %v327 = vunpack.c.l.b16 %v124
    %v328 = vunpack.c.l.b16 %v125
    %v329 = vunpack.c.l.b16 %v126
    %v330 = vunpack.c.l.b16 %v127
    %v331 = vunpack.c.l.b16 %v128
    %v332 = vunpack.c.l.b16 %v129
    %v333 = vunpack.c.l.b16 %v130
    %v334 = vunpack.c.l.b16 %v131
    %v335 = vunpack.c.l.b16 %v132
    %v336 = vunpack.c.l.b16 %v133
    %v337 = vunpack.c.l.b16 %v134
    %v338 = vunpack.c.l.b16 %v135
    %v339 = vunpack.c.l.b16 %v136
    %v340 = vunpack.c.l.b16 %v137
    %v341 = vunpack.c.l.b16 %v138
    %v342 = vunpack.c.l.b16 %v139
    %v343 = vunpack.c.l.b16 %v140
    %v344 = vunpack.c.l.b16 %v141
    %v345 = vunpack.c.l.b16 %v142
    %v346 = vunpack.c.l.b16 %v143
    %v347 = vunpack.c.l.b16 %v144
    %v348 = vunpack.c.l.b16 %v145
    %v349 = vpack.c.b16 %v252, %v251
    %v350 = vpack.c.b16 %v254, %v253
    %v351 = vpack.c.b16 %v256, %v255
    %v352 = vpack.c.b16 %v258, %v257
    %v353 = vpack.c.b16 %v260, %v259
    %v354 = vpack.c.b16 %v262, %v261
    %v355 = vpack.c.b16 %v264, %v263
    %v356 = vpack.c.b16 %v266, %v265
    %v357 = vpack.c.b16 %v268, %v267
    %v358 = vpack.c.b16 %v270, %v269
    %v359 = vpack.c.b16 %v272, %v271
    %v360 = vpack.c.b16 %v274, %v273
    %v361 = vpack.c.b16 %v276, %v275
    %v362 = vpack.c.b16 %v278, %v277
    %v363 = vpack.c.b16 %v280, %v279
    %v364 = vpack.c.b16 %v282, %v281
    %v365 = vpack.c.b16 %v284, %v283
    %v366 = vpack.c.b16 %v286, %v285
    %v367 = vpack.c.b16 %v288, %v287
    %v368 = vpack.c.b16 %v290, %v289
    %v369 = vpack.c.b16 %v292, %v291
    %v370 = vpack.c.b16 %v294, %v293
    %v371 = vpack.c.b16 %v296, %v295
    %v372 = vpack.c.b16 %v298, %v297
    %v373 = vpack.c.b16 %v300, %v299
    %v374 = vpack.c.b16 %v302, %v301
    %v375 = vpack.c.b16 %v304, %v303
    %v376 = vpack.c.b16 %v306, %v305
    %v377 = vpack.c.b16 %v308, %v307
    %v378 = vpack.c.b16 %v310, %v309
    %v379 = vpack.c.b16 %v312, %v311
    %v380 = vpack.c.b16 %v314, %v313
    %v381 = vpack.c.b16 %v316, %v315
    %v382 = vpack.c.b16 %v318, %v317
    %v383 = vpack.c.b16 %v320, %v319
    %v384 = vpack.c.b16 %v322, %v321
    %v385 = vpack.c.b16 %v324, %v323
    %v386 = vpack.c.b16 %v326, %v325
    %v387 = vpack.c.b16 %v328, %v327
    %v388 = vpack.c.b16 %v330, %v329
    %v389 = vpack.c.b16 %v332, %v331
    %v390 = vpack.c.b16 %v334, %v333
    %v391 = vpack.c.b16 %v336, %v335
    %v392 = vpack.c.b16 %v338, %v337
    %v393 = vpack.c.b16 %v340, %v339
    %v394 = vpack.c.b16 %v342, %v341
    %v395 = vpack.c.b16 %v344, %v343
    %v396 = vpack.c.b16 %v346, %v345
    %v397 = vpack.c.b16 %v348, %v347
    %vm447 = vcmask 130048
    %v449 = vsel %vm447, %v47, 0
    %451 = vmatprep.subr.bf16.mxu0 0
    %452 = vmatpush1.bf16.msra.mxu0 %v349
    %453 = vmatprep.subr.bf16.mxu0 0
    %454 = vmatpush1.bf16.msra.mxu0 %v350
    %455 = vmatprep.subr.bf16.mxu0 0
    %456 = vmatpush1.bf16.msra.mxu0 %v351
    %457 = vmatprep.subr.bf16.mxu0 0
    %458 = vmatpush1.bf16.msra.mxu0 %v352
    %459 = vmatprep.subr.bf16.mxu0 0
    %460 = vmatpush1.bf16.msra.mxu0 %v353
    %461 = vmatprep.subr.bf16.mxu0 0
    %462 = vmatpush1.bf16.msra.mxu0 %v354
    %463 = vmatprep.subr.bf16.mxu0 0
    %464 = vmatpush1.bf16.msra.mxu0 %v355
    %465 = vmatprep.subr.bf16.mxu0 0
    %466 = vmatpush1.bf16.msra.mxu0 %v356
    %467 = vmatprep.subr.bf16.mxu0 0
    %468 = vmatpush1.bf16.msra.mxu0 %v357
    %469 = vmatprep.subr.bf16.mxu0 0
    %470 = vmatpush1.bf16.msra.mxu0 %v358
    %471 = vmatprep.subr.bf16.mxu0 0
    %472 = vmatpush1.bf16.msra.mxu0 %v359
    %473 = vmatprep.subr.bf16.mxu0 0
    %474 = vmatpush1.bf16.msra.mxu0 %v360
    %475 = vmatprep.subr.bf16.mxu0 0
    %476 = vmatpush1.bf16.msra.mxu0 %v361
    %477 = vmatprep.subr.bf16.mxu0 0
    %478 = vmatpush1.bf16.msra.mxu0 %v362
    %479 = vmatprep.subr.bf16.mxu0 0
    %480 = vmatpush1.bf16.msra.mxu0 %v363
    %481 = vmatprep.subr.bf16.mxu0 0
    %482 = vmatpush1.bf16.msra.mxu0 %v364
    %483 = vmatprep.mubr.bf16.mxu0 %v42
    %484 = vmatmul.mubr.bf16.gmra.mrb[0].mxu0 %v41
    %v485 = vpop.f32.mrb[0].mxu0
    %v486 = vadd.f32 %v151, %v485
    %v487 = vpop.f32.mrb[0].mxu0
    %v488 = vpop.f32.mrb[0].mxu0
    %v489 = vpop.f32.mrb[0].mxu0
    %490 = vdwg.mxu0
    %491 = vmatprep.subr.bf16.mxu0 0
    %492 = vmatpush1.bf16.msra.mxu0 %v365
    %493 = vmatprep.subr.bf16.mxu0 0
    %494 = vmatpush1.bf16.msra.mxu0 %v366
    %495 = vmatprep.subr.bf16.mxu0 0
    %496 = vmatpush1.bf16.msra.mxu0 %v367
    %497 = vmatprep.subr.bf16.mxu0 0
    %498 = vmatpush1.bf16.msra.mxu0 %v368
    %499 = vmatprep.subr.bf16.mxu0 0
    %500 = vmatpush1.bf16.msra.mxu0 %v369
    %501 = vmatprep.subr.bf16.mxu0 0
    %502 = vmatpush1.bf16.msra.mxu0 %v370
    %503 = vmatprep.subr.bf16.mxu0 0
    %504 = vmatpush1.bf16.msra.mxu0 %v371
    %505 = vmatprep.subr.bf16.mxu0 0
    %506 = vmatpush1.bf16.msra.mxu0 %v372
    %507 = vmatprep.subr.bf16.mxu0 0
    %508 = vmatpush1.bf16.msra.mxu0 %v373
    %509 = vmatprep.subr.bf16.mxu0 0
    %510 = vmatpush1.bf16.msra.mxu0 %v374
    %511 = vmatprep.subr.bf16.mxu0 0
    %512 = vmatpush1.bf16.msra.mxu0 %v375
    %513 = vmatprep.subr.bf16.mxu0 0
    %514 = vmatpush1.bf16.msra.mxu0 %v376
    %515 = vmatprep.subr.bf16.mxu0 0
    %516 = vmatpush1.bf16.msra.mxu0 %v377
    %517 = vmatprep.subr.bf16.mxu0 0
    %518 = vmatpush1.bf16.msra.mxu0 %v378
    %519 = vmatprep.subr.bf16.mxu0 0
    %520 = vmatpush1.bf16.msra.mxu0 %v379
    %521 = vmatprep.subr.bf16.mxu0 0
    %522 = vmatpush1.bf16.msra.mxu0 %v380
    %523 = vmatprep.mubr.bf16.mxu0 %v44
    %524 = vmatmul.mubr.bf16.gmra.mrb[0].mxu0 %v43
    %v525 = vpop.f32.mrb[0].mxu0
    %v526 = vadd.f32 %v486, %v525
    %v527 = vpop.f32.mrb[0].mxu0
    %v528 = vpop.f32.mrb[0].mxu0
    %v529 = vpop.f32.mrb[0].mxu0
    %530 = vdwg.mxu0
    %531 = vmatprep.subr.bf16.mxu0 0
    %532 = vmatpush1.bf16.msra.mxu0 %v381
    %533 = vmatprep.subr.bf16.mxu0 0
    %534 = vmatpush1.bf16.msra.mxu0 %v382
    %535 = vmatprep.subr.bf16.mxu0 0
    %536 = vmatpush1.bf16.msra.mxu0 %v383
    %537 = vmatprep.subr.bf16.mxu0 0
    %538 = vmatpush1.bf16.msra.mxu0 %v384
    %539 = vmatprep.subr.bf16.mxu0 0
    %540 = vmatpush1.bf16.msra.mxu0 %v385
    %541 = vmatprep.subr.bf16.mxu0 0
    %542 = vmatpush1.bf16.msra.mxu0 %v386
    %543 = vmatprep.subr.bf16.mxu0 0
    %544 = vmatpush1.bf16.msra.mxu0 %v387
    %545 = vmatprep.subr.bf16.mxu0 0
    %546 = vmatpush1.bf16.msra.mxu0 %v388
    %547 = vmatprep.subr.bf16.mxu0 0
    %548 = vmatpush1.bf16.msra.mxu0 %v389
    %549 = vmatprep.subr.bf16.mxu0 0
    %550 = vmatpush1.bf16.msra.mxu0 %v390
    %551 = vmatprep.subr.bf16.mxu0 0
    %552 = vmatpush1.bf16.msra.mxu0 %v391
    %553 = vmatprep.subr.bf16.mxu0 0
    %554 = vmatpush1.bf16.msra.mxu0 %v392
    %555 = vmatprep.subr.bf16.mxu0 0
    %556 = vmatpush1.bf16.msra.mxu0 %v393
    %557 = vmatprep.subr.bf16.mxu0 0
    %558 = vmatpush1.bf16.msra.mxu0 %v394
    %559 = vmatprep.subr.bf16.mxu0 0
    %560 = vmatpush1.bf16.msra.mxu0 %v395
    %561 = vmatprep.subr.bf16.mxu0 0
    %562 = vmatpush1.bf16.msra.mxu0 %v396
    %563 = vmatprep.mubr.bf16.mxu0 %v46
    %564 = vmatmul.mubr.bf16.gmra.mrb[0].mxu0 %v45
    %v565 = vpop.f32.mrb[0].mxu0
    %v566 = vadd.f32 %v526, %v565
    %v567 = vpop.f32.mrb[0].mxu0
    %v568 = vpop.f32.mrb[0].mxu0
    %v569 = vpop.f32.mrb[0].mxu0
    %570 = vdwg.mxu0
    %571 = vmatprep.subr.bf16.mxu0 0
    %572 = vmatpush1.bf16.msra.mxu0 %v397
    %573 = vmatprep.subr.bf16.mxu0 0
    %574 = vmatpush1.bf16.msra.mxu0 0
    %575 = vmatprep.subr.bf16.mxu0 0
    %576 = vmatpush1.bf16.msra.mxu0 0
    %577 = vmatprep.subr.bf16.mxu0 0
    %578 = vmatpush1.bf16.msra.mxu0 0
    %579 = vmatprep.subr.bf16.mxu0 0
    %580 = vmatpush1.bf16.msra.mxu0 0
    %581 = vmatprep.subr.bf16.mxu0 0
    %582 = vmatpush1.bf16.msra.mxu0 0
    %583 = vmatprep.subr.bf16.mxu0 0
    %584 = vmatpush1.bf16.msra.mxu0 0
    %585 = vmatprep.subr.bf16.mxu0 0
    %586 = vmatpush1.bf16.msra.mxu0 0
    %587 = vmatprep.subr.bf16.mxu0 0
    %588 = vmatpush1.bf16.msra.mxu0 0
    %589 = vmatprep.subr.bf16.mxu0 0
    %590 = vmatpush1.bf16.msra.mxu0 0
    %591 = vmatprep.subr.bf16.mxu0 0
    %592 = vmatpush1.bf16.msra.mxu0 0
    %593 = vmatprep.subr.bf16.mxu0 0
    %594 = vmatpush1.bf16.msra.mxu0 0
    %595 = vmatprep.subr.bf16.mxu0 0
    %596 = vmatpush1.bf16.msra.mxu0 0
    %597 = vmatprep.subr.bf16.mxu0 0
    %598 = vmatpush1.bf16.msra.mxu0 0
    %599 = vmatprep.subr.bf16.mxu0 0
    %600 = vmatpush1.bf16.msra.mxu0 0
    %601 = vmatprep.subr.bf16.mxu0 0
    %602 = vmatpush1.bf16.msra.mxu0 0
    %603 = vmatprep.mubr.bf16.mxu0 0
    %604 = vmatmul.mubr.bf16.gmra.mrb[0].mxu0 %v449
    %v605 = vpop.f32.mrb[0].mxu0
    %v606 = vadd.f32 %v566, %v605
    %v607 = vpop.f32.mrb[0].mxu0
    %v608 = vpop.f32.mrb[0].mxu0
    %v609 = vpop.f32.mrb[0].mxu0
    %610 = vdwg.mxu0
    %v611 = vmax.f32 %v606, 0.0
    %v612 = vld [vmem:[%s3] sm:$0xff]
    %v613 = vld [vmem:[%s3 + $0x8] sm:$0xff]
    %v614 = vld [vmem:[%s3 + $0x10] sm:$0xff]
    %v615 = vld [vmem:[%s3 + $0x18] sm:$0xff]
    %v616 = vld [vmem:[%s3 + $0x20] sm:$0xff]
    %v617 = vld [vmem:[%s3 + $0x28] sm:$0xff]
    %v618 = vld [vmem:[%s3 + $0x30] sm:$0xff]
    %v619 = vld [vmem:[%s3 + $0x38] sm:$0xff]
    %v620 = vld [vmem:[%s4] sm:$0x1]
    %v622 = vlaneseq
    %v623 = vshrl.u32 %v622, 7
    %v624 = vsub.s32 0, %v623
    %v625 = vrot.slane %v620, %v624
    %vm627 = vcmask 523264
    %v629 = vsel %vm627, %v611, 0
    %631 = vmatprep.subr.mxu0 0.0
    %632 = vmatpush1.msra.mxu0 %v612
    %633 = vmatprep.subr.mxu0 0.0
    %634 = vmatpush1.msra.mxu0 %v613
    %635 = vmatprep.subr.mxu0 0.0
    %636 = vmatpush1.msra.mxu0 %v614
    %637 = vmatprep.subr.mxu0 0.0
    %638 = vmatpush1.msra.mxu0 %v615
    %639 = vmatprep.subr.mxu0 0.0
    %640 = vmatpush1.msra.mxu0 %v616
    %641 = vmatprep.subr.mxu0 0.0
    %642 = vmatpush1.msra.mxu0 %v617
    %643 = vmatprep.subr.mxu0 0.0
    %644 = vmatpush1.msra.mxu0 %v618
    %645 = vmatprep.subr.mxu0 0.0
    %646 = vmatpush1.msra.mxu0 %v619
    %647 = vmatprep.subr.mxu0 0.0
    %648 = vmatpush1.msra.mxu0 0.0
    %649 = vmatprep.subr.mxu0 0.0
    %650 = vmatpush1.msra.mxu0 0.0
    %651 = vmatprep.subr.mxu0 0.0
    %652 = vmatpush1.msra.mxu0 0.0
    %653 = vmatprep.subr.mxu0 0.0
    %654 = vmatpush1.msra.mxu0 0.0
    %655 = vmatprep.subr.mxu0 0.0
    %656 = vmatpush1.msra.mxu0 0.0
    %657 = vmatprep.subr.mxu0 0.0
    %658 = vmatpush1.msra.mxu0 0.0
    %659 = vmatprep.subr.mxu0 0.0
    %660 = vmatpush1.msra.mxu0 0.0
    %661 = vmatprep.subr.mxu0 0.0
    %662 = vmatpush1.msra.mxu0 0.0
    %663 = vmatprep.subr.mxu0 0.0
    %664 = vmatpush1.msra.mxu0 0.0
    %665 = vmatprep.subr.mxu0 0.0
    %666 = vmatpush1.msra.mxu0 0.0
    %667 = vmatprep.subr.mxu0 0.0
    %668 = vmatpush1.msra.mxu0 0.0
    %669 = vmatprep.subr.mxu0 0.0
    %670 = vmatpush1.msra.mxu0 0.0
    %671 = vmatprep.subr.mxu0 0.0
    %672 = vmatpush1.msra.mxu0 0.0
    %673 = vmatprep.subr.mxu0 0.0
    %674 = vmatpush1.msra.mxu0 0.0
    %675 = vmatprep.subr.mxu0 0.0
    %676 = vmatpush1.msra.mxu0 0.0
    %677 = vmatprep.subr.mxu0 0.0
    %678 = vmatpush1.msra.mxu0 0.0
    %679 = vmatprep.subr.mxu0 0.0
    %680 = vmatpush1.msra.mxu0 0.0
    %681 = vmatprep.subr.mxu0 0.0
    %682 = vmatpush1.msra.mxu0 0.0
    %683 = vmatprep.subr.mxu0 0.0
    %684 = vmatpush1.msra.mxu0 0.0
    %685 = vmatprep.subr.mxu0 0.0
    %686 = vmatpush1.msra.mxu0 0.0
    %687 = vmatprep.subr.mxu0 0.0
    %688 = vmatpush1.msra.mxu0 0.0
    %689 = vmatprep.subr.mxu0 0.0
    %690 = vmatpush1.msra.mxu0 0.0
    %691 = vmatprep.subr.mxu0 0.0
    %692 = vmatpush1.msra.mxu0 0.0
    %693 = vmatprep.subr.mxu0 0.0
    %694 = vmatpush1.msra.mxu0 0.0
    %695 = vmatprep.mubr.f32.mxu0 0.0
    %696 = vmatmul.mubr.f32.gmra.mrb[0].mxu0 %v629
    %v697 = vpop.f32.mrb[0].mxu0
    %v698 = vadd.f32 %v625, %v697
    %v699 = vpop.f32.mrb[0].mxu0
    %700 = vdwg.mxu0
    %v701 = vmax.f32 %v698, 0.0
    %v702 = vld [vmem:[%s5] sm:$0xff]
    %v703 = vld [vmem:[%s5 + $0x8] sm:$0xff]
    %v704 = vld [vmem:[%s5 + $0x10] sm:$0xff]
    %v705 = vld [vmem:[%s5 + $0x18] sm:$0xff]
    %v706 = vld [vmem:[%s5 + $0x20] sm:$0xff]
    %v707 = vld [vmem:[%s5 + $0x28] sm:$0xff]
    %v708 = vld [vmem:[%s5 + $0x30] sm:$0xff]
    %v709 = vld [vmem:[%s5 + $0x38] sm:$0xff]
    %v710 = vld [vmem:[%s6] sm:$0x1]
    %v712 = vlaneseq
    %v713 = vshrl.u32 %v712, 7
    %v714 = vsub.s32 0, %v713
    %v715 = vrot.slane %v710, %v714
    %v718 = vsel %vm627, %v701, 0
    %720 = vmatprep.subr.mxu0 0.0
    %721 = vmatpush1.msra.mxu0 %v702
    %722 = vmatprep.subr.mxu0 0.0
    %723 = vmatpush1.msra.mxu0 %v703
    %724 = vmatprep.subr.mxu0 0.0
    %725 = vmatpush1.msra.mxu0 %v704
    %726 = vmatprep.subr.mxu0 0.0
    %727 = vmatpush1.msra.mxu0 %v705
    %728 = vmatprep.subr.mxu0 0.0
    %729 = vmatpush1.msra.mxu0 %v706
    %730 = vmatprep.subr.mxu0 0.0
    %731 = vmatpush1.msra.mxu0 %v707
    %732 = vmatprep.subr.mxu0 0.0
    %733 = vmatpush1.msra.mxu0 %v708
    %734 = vmatprep.subr.mxu0 0.0
    %735 = vmatpush1.msra.mxu0 %v709
    %736 = vmatprep.subr.mxu0 0.0
    %737 = vmatpush1.msra.mxu0 0.0
    %738 = vmatprep.subr.mxu0 0.0
    %739 = vmatpush1.msra.mxu0 0.0
    %740 = vmatprep.subr.mxu0 0.0
    %741 = vmatpush1.msra.mxu0 0.0
    %742 = vmatprep.subr.mxu0 0.0
    %743 = vmatpush1.msra.mxu0 0.0
    %744 = vmatprep.subr.mxu0 0.0
    %745 = vmatpush1.msra.mxu0 0.0
    %746 = vmatprep.subr.mxu0 0.0
    %747 = vmatpush1.msra.mxu0 0.0
    %748 = vmatprep.subr.mxu0 0.0
    %749 = vmatpush1.msra.mxu0 0.0
    %750 = vmatprep.subr.mxu0 0.0
    %751 = vmatpush1.msra.mxu0 0.0
    %752 = vmatprep.subr.mxu0 0.0
    %753 = vmatpush1.msra.mxu0 0.0
    %754 = vmatprep.subr.mxu0 0.0
    %755 = vmatpush1.msra.mxu0 0.0
    %756 = vmatprep.subr.mxu0 0.0
    %757 = vmatpush1.msra.mxu0 0.0
    %758 = vmatprep.subr.mxu0 0.0
    %759 = vmatpush1.msra.mxu0 0.0
    %760 = vmatprep.subr.mxu0 0.0
    %761 = vmatpush1.msra.mxu0 0.0
    %762 = vmatprep.subr.mxu0 0.0
    %763 = vmatpush1.msra.mxu0 0.0
    %764 = vmatprep.subr.mxu0 0.0
    %765 = vmatpush1.msra.mxu0 0.0
    %766 = vmatprep.subr.mxu0 0.0
    %767 = vmatpush1.msra.mxu0 0.0
    %768 = vmatprep.subr.mxu0 0.0
    %769 = vmatpush1.msra.mxu0 0.0
    %770 = vmatprep.subr.mxu0 0.0
    %771 = vmatpush1.msra.mxu0 0.0
    %772 = vmatprep.subr.mxu0 0.0
    %773 = vmatpush1.msra.mxu0 0.0
    %774 = vmatprep.subr.mxu0 0.0
    %775 = vmatpush1.msra.mxu0 0.0
    %776 = vmatprep.subr.mxu0 0.0
    %777 = vmatpush1.msra.mxu0 0.0
    %778 = vmatprep.subr.mxu0 0.0
    %779 = vmatpush1.msra.mxu0 0.0
    %780 = vmatprep.subr.mxu0 0.0
    %781 = vmatpush1.msra.mxu0 0.0
    %782 = vmatprep.subr.mxu0 0.0
    %783 = vmatpush1.msra.mxu0 0.0
    %784 = vmatprep.mubr.f32.mxu0 0.0
    %785 = vmatmul.mubr.f32.gmra.mrb[0].mxu0 %v718
    %v786 = vpop.f32.mrb[0].mxu0
    %v787 = vadd.f32 %v715, %v786
    %v788 = vpop.f32.mrb[0].mxu0
    %789 = vdwg.mxu0
    %v790 = vmax.f32 %v787, 0.0
    %v791 = vld [vmem:[%s7] sm:$0xff]
    %v792 = vld [vmem:[%s7 + $0x8] sm:$0xff]
    %v793 = vld [vmem:[%s7 + $0x10] sm:$0xff]
    %v794 = vld [vmem:[%s7 + $0x18] sm:$0xff]
    %v795 = vld [vmem:[%s7 + $0x20] sm:$0xff]
    %v796 = vld [vmem:[%s7 + $0x28] sm:$0xff]
    %v797 = vld [vmem:[%s7 + $0x30] sm:$0xff]
    %v798 = vld [vmem:[%s7 + $0x38] sm:$0xff]
    %v799 = vld [vmem:[%s8] sm:$0x1]
    %v801 = vlaneseq
    %v802 = vshrl.u32 %v801, 7
    %v803 = vsub.s32 0, %v802
    %v804 = vrot.slane %v799, %v803
    %v807 = vsel %vm627, %v790, 0
    %809 = vmatprep.subr.mxu0 0.0
    %810 = vmatpush1.msra.mxu0 %v791
    %811 = vmatprep.subr.mxu0 0.0
    %812 = vmatpush1.msra.mxu0 %v792
    %813 = vmatprep.subr.mxu0 0.0
    %814 = vmatpush1.msra.mxu0 %v793
    %815 = vmatprep.subr.mxu0 0.0
    %816 = vmatpush1.msra.mxu0 %v794
    %817 = vmatprep.subr.mxu0 0.0
    %818 = vmatpush1.msra.mxu0 %v795
    %819 = vmatprep.subr.mxu0 0.0
    %820 = vmatpush1.msra.mxu0 %v796
    %821 = vmatprep.subr.mxu0 0.0
    %822 = vmatpush1.msra.mxu0 %v797
    %823 = vmatprep.subr.mxu0 0.0
    %824 = vmatpush1.msra.mxu0 %v798
    %825 = vmatprep.subr.mxu0 0.0
    %826 = vmatpush1.msra.mxu0 0.0
    %827 = vmatprep.subr.mxu0 0.0
    %828 = vmatpush1.msra.mxu0 0.0
    %829 = vmatprep.subr.mxu0 0.0
    %830 = vmatpush1.msra.mxu0 0.0
    %831 = vmatprep.subr.mxu0 0.0
    %832 = vmatpush1.msra.mxu0 0.0
    %833 = vmatprep.subr.mxu0 0.0
    %834 = vmatpush1.msra.mxu0 0.0
    %835 = vmatprep.subr.mxu0 0.0
    %836 = vmatpush1.msra.mxu0 0.0
    %837 = vmatprep.subr.mxu0 0.0
    %838 = vmatpush1.msra.mxu0 0.0
    %839 = vmatprep.subr.mxu0 0.0
    %840 = vmatpush1.msra.mxu0 0.0
    %841 = vmatprep.subr.mxu0 0.0
    %842 = vmatpush1.msra.mxu0 0.0
    %843 = vmatprep.subr.mxu0 0.0
    %844 = vmatpush1.msra.mxu0 0.0
    %845 = vmatprep.subr.mxu0 0.0
    %846 = vmatpush1.msra.mxu0 0.0
    %847 = vmatprep.subr.mxu0 0.0
    %848 = vmatpush1.msra.mxu0 0.0
    %849 = vmatprep.subr.mxu0 0.0
    %850 = vmatpush1.msra.mxu0 0.0
    %851 = vmatprep.subr.mxu0 0.0
    %852 = vmatpush1.msra.mxu0 0.0
    %853 = vmatprep.subr.mxu0 0.0
    %854 = vmatpush1.msra.mxu0 0.0
    %855 = vmatprep.subr.mxu0 0.0
    %856 = vmatpush1.msra.mxu0 0.0
    %857 = vmatprep.subr.mxu0 0.0
    %858 = vmatpush1.msra.mxu0 0.0
    %859 = vmatprep.subr.mxu0 0.0
    %860 = vmatpush1.msra.mxu0 0.0
    %861 = vmatprep.subr.mxu0 0.0
    %862 = vmatpush1.msra.mxu0 0.0
    %863 = vmatprep.subr.mxu0 0.0
    %864 = vmatpush1.msra.mxu0 0.0
    %865 = vmatprep.subr.mxu0 0.0
    %866 = vmatpush1.msra.mxu0 0.0
    %867 = vmatprep.subr.mxu0 0.0
    %868 = vmatpush1.msra.mxu0 0.0
    %869 = vmatprep.subr.mxu0 0.0
    %870 = vmatpush1.msra.mxu0 0.0
    %871 = vmatprep.subr.mxu0 0.0
    %872 = vmatpush1.msra.mxu0 0.0
    %873 = vmatprep.mubr.f32.mxu0 0.0
    %874 = vmatmul.mubr.f32.gmra.mrb[0].mxu0 %v807
    %v875 = vpop.f32.mrb[0].mxu0
    %v876 = vadd.f32 %v804, %v875
    %v877 = vpop.f32.mrb[0].mxu0
    %878 = vdwg.mxu0
    %vm879 = vcmask 80896
    %v880 = vsel %vm879, %v876, -inf
    %881 = vmax.xlane.f32.xlu0 %v880
    %v882 = vpop.xlane.xlu0 %881
    %v883 = vsub.f32 %v876, %v882
    %v884 = vmul.f32 %v883, 1.442695
    %v885 = vpow.pop %v884
    %v886 = vsel %vm879, %v885, 0.0
    %887 = vadd.xlane.f32.xlu0 %v886
    %v888 = vpop.xlane.xlu0 %887
    %v889 = vlog2.pop %v888
    %v890 = vmul.f32 %v889, 0.6931472
    %v891 = vsub.f32 %v883, %v890
    %892 = vst.msk [vmem:[#allocation2] sm:$0xff] %vm879, %v891
    // Predicated region
    $region38: #{net_forward.1} parent=1 // pred_check
      _
    $region39: #{net_forward.1} parent=1 // pred_check_branch
      %894 = sbr.rel (0) target = $region41
    $region40: #{net_forward.1} parent=1 // pred_region
      %s896 = ssub.s32 128, 128
      %897 = vsyncadd [#allocation3], %s896
      %s899 = sshll.u32 [#allocation2], 4
      %s900 = int_to_ptr.vmem [resolvable:$true] %s899
      %902 = dma.vmem_to_hbm [thread:$0]  %s900, 128, %s9, [#allocation3]
    $region41: #{net_forward.1} parent=1 // pred_fallthru
      _
    // Predicated region
    $region42: #{net_forward.1} parent=1 // pred_check
      _
    $region43: #{net_forward.1} parent=1 // pred_check_branch
      %904 = sbr.rel (0) target = $region45
    $region44: #{net_forward.1} parent=1 // pred_region
      %905 = dma.done [#allocation3], 128
    $region45: #{net_forward.1} parent=1 // pred_fallthru
      _
    %906 = vsyncpa [#allocation3], 1

</llo_original>
